<compile_context>
chip_gen: v7x
topology: tpu7x:2x2x1
jax: 0.10.0
libtpu: 0.0.40
codegen_flags: <defaults>
</compile_context>

<pallas_src>
from typing import NamedTuple

import jax
import jax.numpy as jnp
from jax.experimental import pallas as pl
from jax.experimental.pallas import tpu as pltpu

_LANE = 128
_SUBLANE = 8
_EPS = 1e-12  # torch.nn.functional.normalize default eps


def _round_up(n, m):
    return ((n + m - 1) // m) * m


# ---------------------------------------------------------------------------
# Fused kernel: fc1 -> bias -> ReLU -> fc2 -> bias -> L2 normalize (dim=1).
# ---------------------------------------------------------------------------
def _head_norm_kernel(x_ref, w1_ref, b1_ref, w2_ref, b2_ref, o_ref):
    # Cast x to the compute dtype inside VMEM (cheaper than a wrapper-side
    # cast, which would add an extra HBM round trip of x).
    x = x_ref[...].astype(w1_ref.dtype)
    # fc1 on the MXU, f32 accumulation.
    h = jnp.dot(x, w1_ref[...], preferred_element_type=jnp.float32)
    # Bias + ReLU epilogue in f32 on the VPU (v5e has no bf16 VALU).
    h = jnp.maximum(h + b1_ref[...], 0.0)
    # Dropout: identity at inference.
    # fc2: intentional downcast of the f32 fc1 accumulator to the compute
    # dtype (bf16 on the fast path) for the second MXU pass — inference-only.
    z = jnp.dot(h.astype(w2_ref.dtype), w2_ref[...],
                preferred_element_type=jnp.float32)
    z = z + b2_ref[...]
    # Fused L2 normalization over the feature axis (module's normalize(dim=1)).
    # Lane-padded feature columns are exactly 0, so they don't perturb ssq.
    ssq = jnp.sum(z * z, axis=-1, keepdims=True)
    inv_norm = jax.lax.rsqrt(jnp.maximum(ssq, _EPS * _EPS))  # 1/max(||z||,eps)
    o_ref[...] = (z * inv_norm).astype(o_ref.dtype)


# ---------------------------------------------------------------------------
# One-time parameter preparation (hoisted out of the per-call path).
# ---------------------------------------------------------------------------
class BioViLHeadParams(NamedTuple):
    w1: jax.Array   # (D, Hp)   compute dtype, H zero-padded to lane multiple
    b1: jax.Array   # (1, Hp)   float32
    w2: jax.Array   # (Hp, Cp)  compute dtype
    b2: jax.Array   # (1, Cp)   float32


def prepare_biovil_head_params(w1, b1, w2, b2, *, compute_dtype=jnp.bfloat16):
    """One-time cast + lane padding of the projection-head weights.

    Call once (e.g. at model load) and reuse the result for every embed call.
    bf16 compute is the fast path on all of v5e/v6e/v7x (bf16 MXU operands,
    f32 accumulation); the in-kernel epilogue stays in f32 either way.
    For the real BioViL head (D=H=2048, C=128) no padding copy happens —
    only the dtype cast.
    """
    D, H = w1.shape
    H2, C = w2.shape
    assert H2 == H, "fc1 output width must equal fc2 input width"
    Hp, Cp = _round_up(H, _LANE), _round_up(C, _LANE)

    def _pad(a, shape, dtype):
        a = a.astype(dtype)
        if a.shape == shape:
            return a
        return jnp.zeros(shape, dtype).at[:a.shape[0], :a.shape[1]].set(a)

    return BioViLHeadParams(
        w1=_pad(w1, (D, Hp), compute_dtype),
        b1=_pad(b1[None, :], (1, Hp), jnp.float32),
        w2=_pad(w2, (Hp, Cp), compute_dtype),
        b2=_pad(b2[None, :], (1, Cp), jnp.float32),
    )


# ---------------------------------------------------------------------------
# Hot-path wrapper.
# ---------------------------------------------------------------------------
def biovil_embed_head(x, params: BioViLHeadParams, *, out_features=None,
                      block_b=256, single_tile_max=128, out_dtype=None):
    """x: (B, D) backbone feature; returns L2-normalized embedding (B, C).

    x is passed untouched (no pad / copy / cast in the wrapper); the batch is
    tiled with >= 2 grid steps whenever B > single_tile_max so v7x's two
    TensorCores both get work and x/out DMA overlaps fc1 on the MXU.
    """
    B, D = x.shape
    assert params.w1.shape[0] == D, "x feature dim must match fc1 input dim"
    Hp = params.w1.shape[1]
    Cp = params.w2.shape[1]
    C = Cp if out_features is None else out_features
    out_dtype = x.dtype if out_dtype is None else out_dtype

    # Batch tile: <=block_b rows, multiple of 8 sublanes, and at least two
    # tiles whenever we take the grid path (v7x dual-TC split; pipelining).
    if B <= single_tile_max:
        tb, n_tiles = B, 1
    else:
        tb = min(_round_up(block_b, _SUBLANE),
                 _round_up(pl.cdiv(B, 2), _SUBLANE))
        n_tiles = pl.cdiv(B, tb)

    # VMEM budget: weights single-buffered, x/out double-buffered, f32
    # intermediates (h, z) plus headroom.  Clamp inside v7x's 64 MiB.
    w_bytes = sum(int(a.size) * a.dtype.itemsize for a in params)
    vmem_est = (w_bytes
                + 2 * tb * D * x.dtype.itemsize          # x blocks (x2 buf)
                + 2 * tb * Cp * jnp.dtype(out_dtype).itemsize
                + tb * Hp * 4 + 2 * tb * Cp * 4)          # f32 intermediates
    vmem_limit = int(min(max(2 * vmem_est, 32 * 1024 * 1024),
                         64 * 1024 * 1024))

    out_shape = jax.ShapeDtypeStruct((B, Cp), out_dtype)
    vmem = pltpu.MemorySpace.VMEM

    if n_tiles == 1:
        # Small batch: grid-free, full-array VMEM refs, no pipeline machinery.
        out = pl.pallas_call(
            _head_norm_kernel,
            out_shape=out_shape,
            in_specs=[pl.BlockSpec(memory_space=vmem)] * 5,
            out_specs=pl.BlockSpec(memory_space=vmem),
            compiler_params=pltpu.CompilerParams(
                vmem_limit_bytes=vmem_limit),
        )(x, params.w1, params.b1, params.w2, params.b2)
    else:
        # Batch-tiled: x/out blocks follow the grid index (ragged last block is
        # handled by masked edge loads/stores); weights/biases are untiled VMEM
        # residents — a single copy, no per-step re-DMA, no double-buffering.
        out = pl.pallas_call(
            _head_norm_kernel,
            out_shape=out_shape,
            grid=(n_tiles,),
            in_specs=[
                pl.BlockSpec((tb, D), lambda i: (i, 0)),   # x tile
                pl.BlockSpec(memory_space=vmem),           # w1 (VMEM resident)
                pl.BlockSpec(memory_space=vmem),           # b1
                pl.BlockSpec(memory_space=vmem),           # w2
                pl.BlockSpec(memory_space=vmem),           # b2
            ],
            out_specs=pl.BlockSpec((tb, Cp), lambda i: (i, 0)),
            compiler_params=pltpu.CompilerParams(
                dimension_semantics=("parallel",),  # v7x dual-TC; no-op v5e/v6e
                vmem_limit_bytes=vmem_limit),
        )(x, params.w1, params.b1, params.w2, params.b2)

    # Strip lane padding of the output only when the head width needs it
    # (real head C=128 -> no-op, no extra copy).
    if C != Cp:
        out = out[:, :C]
    return out


# ---------------------------------------------------------------------------
# Pure-JAX reference (head + L2 normalize) with matching compute dtype.
# ---------------------------------------------------------------------------
def reference_embed_head(x, w1, b1, w2, b2, compute_dtype):
    xc = x.astype(compute_dtype)
    h = jnp.dot(xc, w1.astype(compute_dtype),
                preferred_element_type=jnp.float32) + b1.astype(jnp.float32)
    h = jnp.maximum(h, 0.0)
    z = jnp.dot(h.astype(compute_dtype), w2.astype(compute_dtype),
                preferred_element_type=jnp.float32) + b2.astype(jnp.float32)
    norm = jnp.sqrt(jnp.sum(z * z, axis=-1, keepdims=True))
    return (z / jnp.maximum(norm, _EPS)).astype(x.dtype)


if __name__ == "__main__":
    key = jax.random.PRNGKey(0)
    kx, kw1, kb1, kw2, kb2, kx2, kw3, kb3, kw4, kb4, kx3 = jax.random.split(key, 11)

    embed_head = jax.jit(
        biovil_embed_head,
        static_argnames=("out_features", "block_b", "single_tile_max",
                         "out_dtype"))

    # ------------------------------------------------------------------
    # Head A: lane-aligned small shapes (same structure as the real head).
    # ------------------------------------------------------------------
    B, D, H, C = 8, 256, 512, 128
    x = jax.random.normal(kx, (B, D), jnp.float32)
    w1 = jax.random.uniform(kw1, (D, H), jnp.float32, -1.0, 1.0) / jnp.sqrt(D)
    b1 = jax.random.uniform(kb1, (H,), jnp.float32, -1.0, 1.0) / jnp.sqrt(D)
    w2 = jax.random.uniform(kw2, (H, C), jnp.float32, -1.0, 1.0) / jnp.sqrt(H)
    b2 = jax.random.uniform(kb2, (C,), jnp.float32, -1.0, 1.0) / jnp.sqrt(H)

    # 1) f32 compute, single-tile grid-free path — exact semantics check.
    params_f32 = prepare_biovil_head_params(w1, b1, w2, b2,
                                            compute_dtype=jnp.float32)
    out_f32 = jax.block_until_ready(embed_head(x, params_f32, out_features=C))
    ref_f32 = reference_embed_head(x, w1, b1, w2, b2, jnp.float32)
    assert out_f32.shape == (B, C)
    assert jnp.allclose(out_f32, ref_f32, atol=1e-4, rtol=1e-4), "f32 mismatch"
    assert jnp.allclose(jnp.sum(out_f32 * out_f32, axis=1), 1.0, atol=1e-4)

    # 2) bf16 MXU path (default / preferred on all generations), single tile.
    params_bf16 = prepare_biovil_head_params(w1, b1, w2, b2)  # prepared ONCE
    out_bf16 = jax.block_until_ready(embed_head(x, params_bf16, out_features=C))
    ref_bf16 = reference_embed_head(x, w1, b1, w2, b2, jnp.bfloat16)
    assert jnp.allclose(out_bf16, ref_bf16, atol=2e-3, rtol=2e-3), "bf16 mismatch"

    # 3) bf16, batch-tiled path reusing the SAME prepared params: grid over the
    #    batch axis ('parallel', >= 2 tiles), VMEM-resident weights, ragged last
    #    block handled by masked edge stores (272 = 2*128 + 16).
    B2 = 272
    x2 = jax.random.normal(kx2, (B2, D), jnp.float32)
    out_tiled = jax.block_until_ready(
        embed_head(x2, params_bf16, out_features=C, block_b=128))
    ref_tiled = reference_embed_head(x2, w1, b1, w2, b2, jnp.bfloat16)
    assert out_tiled.shape == (B2, C)
    assert jnp.allclose(out_tiled, ref_tiled, atol=2e-3, rtol=2e-3), \
        "tiled bf16 mismatch"

    # ------------------------------------------------------------------
    # Head B: non-lane-aligned dims exercise the one-time H/C lane padding
    # and the final output slice.
    # ------------------------------------------------------------------
    B3, D3, H3, C3 = 8, 32, 64, 16
    x3 = jax.random.normal(kx3, (B3, D3), jnp.float32)
    w3 = jax.random.uniform(kw3, (D3, H3), jnp.float32, -1.0, 1.0) / jnp.sqrt(D3)
    b3 = jax.random.uniform(kb3, (H3,), jnp.float32, -1.0, 1.0) / jnp.sqrt(D3)
    w4 = jax.random.uniform(kw4, (H3, C3), jnp.float32, -1.0, 1.0) / jnp.sqrt(H3)
    b4 = jax.random.uniform(kb4, (C3,), jnp.float32, -1.0, 1.0) / jnp.sqrt(H3)
    params_small = prepare_biovil_head_params(w3, b3, w4, b4,
                                              compute_dtype=jnp.float32)
    out_small = jax.block_until_ready(
        embed_head(x3, params_small, out_features=C3))
    ref_small = reference_embed_head(x3, w3, b3, w4, b4, jnp.float32)
    assert out_small.shape == (B3, C3)
    assert jnp.allclose(out_small, ref_small, atol=1e-4, rtol=1e-4), \
        "padded-head mismatch"

    print("KERNEL_OK")
</pallas_src>

<mosaic_0001>
module attributes {stable_mosaic.version = 11 : i64} {
  func.func @_head_norm_kernel(%arg0: memref<8x256xf32, #tpu.memory_space<vmem>>, %arg1: memref<256x512xf32, #tpu.memory_space<vmem>>, %arg2: memref<1x512xf32, #tpu.memory_space<vmem>>, %arg3: memref<512x128xf32, #tpu.memory_space<vmem>>, %arg4: memref<1x128xf32, #tpu.memory_space<vmem>>, %arg5: memref<8x128xf32, #tpu.memory_space<vmem>>) attributes {dimension_semantics = [], scalar_prefetch = 0 : i64, scratch_operands = 0 : i64, tpu.core_type = #tpu.core_type<tc>} {
    %c0 = arith.constant 0 : index
    %c0_0 = arith.constant 0 : index
    %0 = vector.load %arg0[%c0, %c0_0] : memref<8x256xf32, #tpu.memory_space<vmem>>, vector<8x256xf32>
    %c0_1 = arith.constant 0 : index
    %c0_2 = arith.constant 0 : index
    %1 = vector.load %arg1[%c0_1, %c0_2] : memref<256x512xf32, #tpu.memory_space<vmem>>, vector<256x512xf32>
    %cst = arith.constant dense<0.000000e+00> : vector<8x512xf32>
    %2 = tpu.matmul %0, %1, %cst {dimension_numbers = #tpu.dot_dimension_numbers<[1], [0], [0], [1], [0, 0, 1, 1], [], []>} : vector<8x256xf32>, vector<256x512xf32>, vector<8x512xf32> -> vector<8x512xf32>
    %c0_3 = arith.constant 0 : index
    %c0_4 = arith.constant 0 : index
    %3 = vector.load %arg2[%c0_3, %c0_4] : memref<1x512xf32, #tpu.memory_space<vmem>>, vector<1x512xf32>
    %4 = vector.broadcast %3 : vector<1x512xf32> to vector<8x512xf32>
    %5 = arith.addf %2, %4 : vector<8x512xf32>
    %cst_5 = arith.constant 0.000000e+00 : f32
    %6 = vector.broadcast %cst_5 : f32 to vector<8x512xf32>
    %7 = arith.maximumf %5, %6 : vector<8x512xf32>
    %c0_6 = arith.constant 0 : index
    %c0_7 = arith.constant 0 : index
    %8 = vector.load %arg3[%c0_6, %c0_7] : memref<512x128xf32, #tpu.memory_space<vmem>>, vector<512x128xf32>
    %cst_8 = arith.constant dense<0.000000e+00> : vector<8x128xf32>
    %9 = tpu.matmul %7, %8, %cst_8 {dimension_numbers = #tpu.dot_dimension_numbers<[1], [0], [0], [1], [0, 0, 1, 1], [], []>} : vector<8x512xf32>, vector<512x128xf32>, vector<8x128xf32> -> vector<8x128xf32>
    %c0_9 = arith.constant 0 : index
    %c0_10 = arith.constant 0 : index
    %10 = vector.load %arg4[%c0_9, %c0_10] : memref<1x128xf32, #tpu.memory_space<vmem>>, vector<1x128xf32>
    %11 = vector.broadcast %10 : vector<1x128xf32> to vector<8x128xf32>
    %12 = arith.addf %9, %11 : vector<8x128xf32>
    %13 = arith.mulf %12, %12 : vector<8x128xf32>
    %cst_11 = arith.constant dense<0.000000e+00> : vector<8xf32>
    %14 = vector.multi_reduction <add>, %13, %cst_11 [1] : vector<8x128xf32> to vector<8xf32>
    %15 = vector.shape_cast %14 : vector<8xf32> to vector<8x1xf32>
    %cst_12 = arith.constant 1.000000e-24 : f32
    %16 = vector.broadcast %cst_12 : f32 to vector<8x1xf32>
    %17 = arith.maximumf %15, %16 : vector<8x1xf32>
    %18 = math.rsqrt %17 : vector<8x1xf32>
    %19 = vector.broadcast %18 : vector<8x1xf32> to vector<8x128xf32>
    %20 = arith.mulf %12, %19 : vector<8x128xf32>
    %c0_13 = arith.constant 0 : index
    %c0_14 = arith.constant 0 : index
    %21 = vector.load %arg5[%c0_13, %c0_14] : memref<8x128xf32, #tpu.memory_space<vmem>>, vector<8x128xf32>
    tpu.vector_store %arg5[%c0_13, %c0_14], %20 {strides = array<i32>} : memref<8x128xf32, #tpu.memory_space<vmem>>, vector<8x128xf32>,
    return
  }
}

</mosaic_0001>

<llo_original>
// kernel: biovil_embed_head.1
$region0: #{biovil_embed_head.1}
  #allocation0 [shape = 'u32[]', space=smem, size = 0x4, offset = 0x4, fixed_abs, tag = 'smem constant byte address 0x4 - core index']
  #allocation1 [shape = 'u32[144,128]{1,0:T(1,128)}', space=vmem, size = 0x12000, scoped, tag = 'internal scratch']
  %s0 = inlined_call_operand.hbm [shape: f32[8,256], index: 0, kind: input, shape index: {}]
  %s1 = inlined_call_operand.hbm [shape: f32[256,512], index: 1, kind: input, shape index: {}]
  %s2 = inlined_call_operand.vmem [shape: f32[1,512], index: 2, kind: input, shape index: {}]
  %s3 = inlined_call_operand.hbm [shape: f32[512,128], index: 3, kind: input, shape index: {}]
  %s4 = inlined_call_operand.vmem [shape: f32[1,128], index: 4, kind: input, shape index: {}]
  %s5 = inlined_call_operand.hbm [shape: f32[8,128], index: 5, kind: output, shape index: {}]
  %s6 = sld [smem:[#allocation0]]
  $region42: #{biovil_embed_head.1} parent=0
    _
  %s8 = ssub.s32 1, %s6
  %s9 = scalar_select 0, %s8, %s6
  $region1: #{biovil_embed_head.1} parent=0
    #allocation2 [shape = 'u8[8192]{0}', space=vmem, size = 0x2000, scoped, tag = 'input window, operand 0, single buffered']
    #allocation3 [shape = 's32[1]{0}', space=sflag, size = 0x4, scoped, tag = 'scoped memory for biovil_embed_head.1']
    #allocation4 [shape = 's32[1]{0}', space=sflag, size = 0x4, scoped, tag = 'scoped memory for biovil_embed_head.1']
    #allocation5 [shape = 'u8[524288]{0}', space=vmem, size = 0x80000, scoped, tag = 'input window, operand 1, single buffered']
    #allocation6 [shape = 's32[1]{0}', space=sflag, size = 0x4, scoped, tag = 'scoped memory for biovil_embed_head.1']
    #allocation7 [shape = 'u8[262144]{0}', space=vmem, size = 0x40000, scoped, tag = 'input window, operand 3, single buffered']
    #allocation8 [shape = 'u8[4096]{0}', space=vmem, size = 0x1000, scoped, tag = 'output window, operand 0, single buffered']
    %10 = vsyncpa [#allocation3], 0
    %11 = vsyncpa [#allocation6], 0
    %12 = vsyncpa [#allocation4], 0
    // Predicated region
    $region2: #{biovil_embed_head.1} parent=1 // pred_check
      _
    $region3: #{biovil_embed_head.1} parent=1 // pred_check_branch
      %14 = sbr.rel (0) target = $region5
    $region4: #{biovil_embed_head.1} parent=1 // pred_region
      %s16 = ssub.s32 256, 256
      %17 = vsyncadd [#allocation3], %s16
      %s19 = sshll.u32 [#allocation2], 4
      %s20 = int_to_ptr.vmem [resolvable:$true] %s19
      %22 = dma.hbm_to_vmem [thread:$0]  %s0, 256, %s20, [#allocation3]
    $region5: #{biovil_embed_head.1} parent=1 // pred_fallthru
      _
    // Predicated region
    $region6: #{biovil_embed_head.1} parent=1 // pred_check
      _
    $region7: #{biovil_embed_head.1} parent=1 // pred_check_branch
      %24 = sbr.rel (0) target = $region9
    $region8: #{biovil_embed_head.1} parent=1 // pred_region
      %s26 = ssub.s32 16384, 16384
      %27 = vsyncadd [#allocation6], %s26
      %s28 = sshll.u32 [#allocation5], 4
      %s29 = int_to_ptr.vmem [resolvable:$true] %s28
      %34 = dma.hbm_to_vmem [thread:$0]  %s1, 16384, %s29, [#allocation6], 512, 512, 32
    $region9: #{biovil_embed_head.1} parent=1 // pred_fallthru
      _
    // Predicated region
    $region10: #{biovil_embed_head.1} parent=1 // pred_check
      _
    $region11: #{biovil_embed_head.1} parent=1 // pred_check_branch
      %36 = sbr.rel (0) target = $region13
    $region12: #{biovil_embed_head.1} parent=1 // pred_region
      _
    $region13: #{biovil_embed_head.1} parent=1 // pred_fallthru
      _
    // Predicated region
    $region14: #{biovil_embed_head.1} parent=1 // pred_check
      _
    $region15: #{biovil_embed_head.1} parent=1 // pred_check_branch
      %38 = sbr.rel (0) target = $region17
    $region16: #{biovil_embed_head.1} parent=1 // pred_region
      %s40 = ssub.s32 8192, 8192
      %41 = vsyncadd [#allocation6], %s40
      %s42 = sshll.u32 [#allocation7], 4
      %s43 = int_to_ptr.vmem [resolvable:$true] %s42
      %48 = dma.hbm_to_vmem [thread:$0]  %s3, 8192, %s43, [#allocation6], 128, 128, 8
    $region17: #{biovil_embed_head.1} parent=1 // pred_fallthru
      _
    // Predicated region
    $region18: #{biovil_embed_head.1} parent=1 // pred_check
      _
    $region19: #{biovil_embed_head.1} parent=1 // pred_check_branch
      %50 = sbr.rel (0) target = $region21
    $region20: #{biovil_embed_head.1} parent=1 // pred_region
      _
    $region21: #{biovil_embed_head.1} parent=1 // pred_fallthru
      _
    // Predicated region
    $region22: #{biovil_embed_head.1} parent=1 // pred_check
      _
    $region23: #{biovil_embed_head.1} parent=1 // pred_check_branch
      %52 = sbr.rel (0) target = $region25
    $region24: #{biovil_embed_head.1} parent=1 // pred_region
      %53 = dma.done [#allocation3], 256
    $region25: #{biovil_embed_head.1} parent=1 // pred_fallthru
      _
    // Predicated region
    $region26: #{biovil_embed_head.1} parent=1 // pred_check
      _
    $region27: #{biovil_embed_head.1} parent=1 // pred_check_branch
      %55 = sbr.rel (0) target = $region29
    $region28: #{biovil_embed_head.1} parent=1 // pred_region
      %56 = dma.done [#allocation6], 16384
    $region29: #{biovil_embed_head.1} parent=1 // pred_fallthru
      _
    // Predicated region
    $region30: #{biovil_embed_head.1} parent=1 // pred_check
      _
    $region31: #{biovil_embed_head.1} parent=1 // pred_check_branch
      %58 = sbr.rel (0) target = $region33
    $region32: #{biovil_embed_head.1} parent=1 // pred_region
      %59 = dma.done [#allocation6], 8192
    $region33: #{biovil_embed_head.1} parent=1 // pred_fallthru
      _
    %v60 = vld [vmem:[#allocation2] sm:$0xff]
    %v61 = vld [vmem:[#allocation2 + $0x8] sm:$0xff]
    %v62 = vld [vmem:[#allocation5] sm:$0xff]
    %v63 = vld [vmem:[#allocation5 + $0x8] sm:$0xff]
    %v64 = vld [vmem:[#allocation5 + $0x10] sm:$0xff]
    %v65 = vld [vmem:[#allocation5 + $0x18] sm:$0xff]
    %v66 = vld [vmem:[#allocation5 + $0x20] sm:$0xff]
    %v67 = vld [vmem:[#allocation5 + $0x28] sm:$0xff]
    %v68 = vld [vmem:[#allocation5 + $0x30] sm:$0xff]
    %v69 = vld [vmem:[#allocation5 + $0x38] sm:$0xff]
    %v70 = vld [vmem:[#allocation5 + $0x40] sm:$0xff]
    %v71 = vld [vmem:[#allocation5 + $0x48] sm:$0xff]
    %v72 = vld [vmem:[#allocation5 + $0x50] sm:$0xff]
    %v73 = vld [vmem:[#allocation5 + $0x58] sm:$0xff]
    %v74 = vld [vmem:[#allocation5 + $0x60] sm:$0xff]
    %v75 = vld [vmem:[#allocation5 + $0x68] sm:$0xff]
    %v76 = vld [vmem:[#allocation5 + $0x70] sm:$0xff]
    %v77 = vld [vmem:[#allocation5 + $0x78] sm:$0xff]
    %v78 = vld [vmem:[#allocation5 + $0x80] sm:$0xff]
    %v79 = vld [vmem:[#allocation5 + $0x88] sm:$0xff]
    %v80 = vld [vmem:[#allocation5 + $0x90] sm:$0xff]
    %v81 = vld [vmem:[#allocation5 + $0x98] sm:$0xff]
    %v82 = vld [vmem:[#allocation5 + $0xa0] sm:$0xff]
    %v83 = vld [vmem:[#allocation5 + $0xa8] sm:$0xff]
    %v84 = vld [vmem:[#allocation5 + $0xb0] sm:$0xff]
    %v85 = vld [vmem:[#allocation5 + $0xb8] sm:$0xff]
    %v86 = vld [vmem:[#allocation5 + $0xc0] sm:$0xff]
    %v87 = vld [vmem:[#allocation5 + $0xc8] sm:$0xff]
    %v88 = vld [vmem:[#allocation5 + $0xd0] sm:$0xff]
    %v89 = vld [vmem:[#allocation5 + $0xd8] sm:$0xff]
    %v90 = vld [vmem:[#allocation5 + $0xe0] sm:$0xff]
    %v91 = vld [vmem:[#allocation5 + $0xe8] sm:$0xff]
    %v92 = vld [vmem:[#allocation5 + $0xf0] sm:$0xff]
    %v93 = vld [vmem:[#allocation5 + $0xf8] sm:$0xff]
    %v94 = vld [vmem:[#allocation5 + $0x100] sm:$0xff]
    %v95 = vld [vmem:[#allocation5 + $0x108] sm:$0xff]
    %v96 = vld [vmem:[#allocation5 + $0x110] sm:$0xff]
    %v97 = vld [vmem:[#allocation5 + $0x118] sm:$0xff]
    %v98 = vld [vmem:[#allocation5 + $0x120] sm:$0xff]
    %v99 = vld [vmem:[#allocation5 + $0x128] sm:$0xff]
    %v100 = vld [vmem:[#allocation5 + $0x130] sm:$0xff]
    %v101 = vld [vmem:[#allocation5 + $0x138] sm:$0xff]
    %v102 = vld [vmem:[#allocation5 + $0x140] sm:$0xff]
    %v103 = vld [vmem:[#allocation5 + $0x148] sm:$0xff]
    %v104 = vld [vmem:[#allocation5 + $0x150] sm:$0xff]
    %v105 = vld [vmem:[#allocation5 + $0x158] sm:$0xff]
    %v106 = vld [vmem:[#allocation5 + $0x160] sm:$0xff]
    %v107 = vld [vmem:[#allocation5 + $0x168] sm:$0xff]
    %v108 = vld [vmem:[#allocation5 + $0x170] sm:$0xff]
    %v109 = vld [vmem:[#allocation5 + $0x178] sm:$0xff]
    %v110 = vld [vmem:[#allocation5 + $0x180] sm:$0xff]
    %v111 = vld [vmem:[#allocation5 + $0x188] sm:$0xff]
    %v112 = vld [vmem:[#allocation5 + $0x190] sm:$0xff]
    %v113 = vld [vmem:[#allocation5 + $0x198] sm:$0xff]
    %v114 = vld [vmem:[#allocation5 + $0x1a0] sm:$0xff]
    %v115 = vld [vmem:[#allocation5 + $0x1a8] sm:$0xff]
    %v116 = vld [vmem:[#allocation5 + $0x1b0] sm:$0xff]
    %v117 = vld [vmem:[#allocation5 + $0x1b8] sm:$0xff]
    %v118 = vld [vmem:[#allocation5 + $0x1c0] sm:$0xff]
    %v119 = vld [vmem:[#allocation5 + $0x1c8] sm:$0xff]
    %v120 = vld [vmem:[#allocation5 + $0x1d0] sm:$0xff]
    %v121 = vld [vmem:[#allocation5 + $0x1d8] sm:$0xff]
    %v122 = vld [vmem:[#allocation5 + $0x1e0] sm:$0xff]
    %v123 = vld [vmem:[#allocation5 + $0x1e8] sm:$0xff]
    %v124 = vld [vmem:[#allocation5 + $0x1f0] sm:$0xff]
    %v125 = vld [vmem:[#allocation5 + $0x1f8] sm:$0xff]
    %v126 = vld [vmem:[#allocation5 + $0x200] sm:$0xff]
    %v127 = vld [vmem:[#allocation5 + $0x208] sm:$0xff]
    %v128 = vld [vmem:[#allocation5 + $0x210] sm:$0xff]
    %v129 = vld [vmem:[#allocation5 + $0x218] sm:$0xff]
    %v130 = vld [vmem:[#allocation5 + $0x220] sm:$0xff]
    %v131 = vld [vmem:[#allocation5 + $0x228] sm:$0xff]
    %v132 = vld [vmem:[#allocation5 + $0x230] sm:$0xff]
    %v133 = vld [vmem:[#allocation5 + $0x238] sm:$0xff]
    %v134 = vld [vmem:[#allocation5 + $0x240] sm:$0xff]
    %v135 = vld [vmem:[#allocation5 + $0x248] sm:$0xff]
    %v136 = vld [vmem:[#allocation5 + $0x250] sm:$0xff]
    %v137 = vld [vmem:[#allocation5 + $0x258] sm:$0xff]
    %v138 = vld [vmem:[#allocation5 + $0x260] sm:$0xff]
    %v139 = vld [vmem:[#allocation5 + $0x268] sm:$0xff]
    %v140 = vld [vmem:[#allocation5 + $0x270] sm:$0xff]
    %v141 = vld [vmem:[#allocation5 + $0x278] sm:$0xff]
    %v142 = vld [vmem:[#allocation5 + $0x280] sm:$0xff]
    %v143 = vld [vmem:[#allocation5 + $0x288] sm:$0xff]
    %v144 = vld [vmem:[#allocation5 + $0x290] sm:$0xff]
    %v145 = vld [vmem:[#allocation5 + $0x298] sm:$0xff]
    %v146 = vld [vmem:[#allocation5 + $0x2a0] sm:$0xff]
    %v147 = vld [vmem:[#allocation5 + $0x2a8] sm:$0xff]
    %v148 = vld [vmem:[#allocation5 + $0x2b0] sm:$0xff]
    %v149 = vld [vmem:[#allocation5 + $0x2b8] sm:$0xff]
    %v150 = vld [vmem:[#allocation5 + $0x2c0] sm:$0xff]
    %v151 = vld [vmem:[#allocation5 + $0x2c8] sm:$0xff]
    %v152 = vld [vmem:[#allocation5 + $0x2d0] sm:$0xff]
    %v153 = vld [vmem:[#allocation5 + $0x2d8] sm:$0xff]
    %v154 = vld [vmem:[#allocation5 + $0x2e0] sm:$0xff]
    %v155 = vld [vmem:[#allocation5 + $0x2e8] sm:$0xff]
    %v156 = vld [vmem:[#allocation5 + $0x2f0] sm:$0xff]
    %v157 = vld [vmem:[#allocation5 + $0x2f8] sm:$0xff]
    %v158 = vld [vmem:[#allocation5 + $0x300] sm:$0xff]
    %v159 = vld [vmem:[#allocation5 + $0x308] sm:$0xff]
    %v160 = vld [vmem:[#allocation5 + $0x310] sm:$0xff]
    %v161 = vld [vmem:[#allocation5 + $0x318] sm:$0xff]
    %v162 = vld [vmem:[#allocation5 + $0x320] sm:$0xff]
    %v163 = vld [vmem:[#allocation5 + $0x328] sm:$0xff]
    %v164 = vld [vmem:[#allocation5 + $0x330] sm:$0xff]
    %v165 = vld [vmem:[#allocation5 + $0x338] sm:$0xff]
    %v166 = vld [vmem:[#allocation5 + $0x340] sm:$0xff]
    %v167 = vld [vmem:[#allocation5 + $0x348] sm:$0xff]
    %v168 = vld [vmem:[#allocation5 + $0x350] sm:$0xff]
    %v169 = vld [vmem:[#allocation5 + $0x358] sm:$0xff]
    %v170 = vld [vmem:[#allocation5 + $0x360] sm:$0xff]
    %v171 = vld [vmem:[#allocation5 + $0x368] sm:$0xff]
    %v172 = vld [vmem:[#allocation5 + $0x370] sm:$0xff]
    %v173 = vld [vmem:[#allocation5 + $0x378] sm:$0xff]
    %v174 = vld [vmem:[#allocation5 + $0x380] sm:$0xff]
    %v175 = vld [vmem:[#allocation5 + $0x388] sm:$0xff]
    %v176 = vld [vmem:[#allocation5 + $0x390] sm:$0xff]
    %v177 = vld [vmem:[#allocation5 + $0x398] sm:$0xff]
    %v178 = vld [vmem:[#allocation5 + $0x3a0] sm:$0xff]
    %v179 = vld [vmem:[#allocation5 + $0x3a8] sm:$0xff]
    %v180 = vld [vmem:[#allocation5 + $0x3b0] sm:$0xff]
    %v181 = vld [vmem:[#allocation5 + $0x3b8] sm:$0xff]
    %v182 = vld [vmem:[#allocation5 + $0x3c0] sm:$0xff]
    %v183 = vld [vmem:[#allocation5 + $0x3c8] sm:$0xff]
    %v184 = vld [vmem:[#allocation5 + $0x3d0] sm:$0xff]
    %v185 = vld [vmem:[#allocation5 + $0x3d8] sm:$0xff]
    %v186 = vld [vmem:[#allocation5 + $0x3e0] sm:$0xff]
    %v187 = vld [vmem:[#allocation5 + $0x3e8] sm:$0xff]
    %v188 = vld [vmem:[#allocation5 + $0x3f0] sm:$0xff]
    %v189 = vld [vmem:[#allocation5 + $0x3f8] sm:$0xff]
    %v190 = vld [vmem:[%s2] sm:$0xf]
    %v192 = vlaneseq
    %v193 = vshrl.u32 %v192, 7
    %v194 = vsub.s32 0, %v193
    %v195 = vrot.slane %v190, %v194
    %v196 = vlaneseq
    %v197 = vshrl.u32 %v196, 7
    %v198 = vsub.s32 1, %v197
    %v199 = vrot.slane %v190, %v198
    %v200 = vlaneseq
    %v201 = vshrl.u32 %v200, 7
    %v202 = vsub.s32 2, %v201
    %v203 = vrot.slane %v190, %v202
    %v204 = vlaneseq
    %v205 = vshrl.u32 %v204, 7
    %v206 = vsub.s32 3, %v205
    %v207 = vrot.slane %v190, %v206
    %212 = vmatprep.subr.mxu0 %v63
    %213 = vmatpush1.msra.mxu0 %v62
    %214 = vmatprep.subr.mxu0 %v67
    %215 = vmatpush1.msra.mxu0 %v66
    %216 = vmatprep.subr.mxu0 %v71
    %217 = vmatpush1.msra.mxu0 %v70
    %218 = vmatprep.subr.mxu0 %v75
    %219 = vmatpush1.msra.mxu0 %v74
    %220 = vmatprep.subr.mxu0 %v79
    %221 = vmatpush1.msra.mxu0 %v78
    %222 = vmatprep.subr.mxu0 %v83
    %223 = vmatpush1.msra.mxu0 %v82
    %224 = vmatprep.subr.mxu0 %v87
    %225 = vmatpush1.msra.mxu0 %v86
    %226 = vmatprep.subr.mxu0 %v91
    %227 = vmatpush1.msra.mxu0 %v90
    %228 = vmatprep.subr.mxu0 %v95
    %229 = vmatpush1.msra.mxu0 %v94
    %230 = vmatprep.subr.mxu0 %v99
    %231 = vmatpush1.msra.mxu0 %v98
    %232 = vmatprep.subr.mxu0 %v103
    %233 = vmatpush1.msra.mxu0 %v102
    %234 = vmatprep.subr.mxu0 %v107
    %235 = vmatpush1.msra.mxu0 %v106
    %236 = vmatprep.subr.mxu0 %v111
    %237 = vmatpush1.msra.mxu0 %v110
    %238 = vmatprep.subr.mxu0 %v115
    %239 = vmatpush1.msra.mxu0 %v114
    %240 = vmatprep.subr.mxu0 %v119
    %241 = vmatpush1.msra.mxu0 %v118
    %242 = vmatprep.subr.mxu0 %v123
    %243 = vmatpush1.msra.mxu0 %v122
    %244 = vmatprep.subr.mxu0 %v127
    %245 = vmatpush1.msra.mxu0 %v126
    %246 = vmatprep.subr.mxu0 %v131
    %247 = vmatpush1.msra.mxu0 %v130
    %248 = vmatprep.subr.mxu0 %v135
    %249 = vmatpush1.msra.mxu0 %v134
    %250 = vmatprep.subr.mxu0 %v139
    %251 = vmatpush1.msra.mxu0 %v138
    %252 = vmatprep.subr.mxu0 %v143
    %253 = vmatpush1.msra.mxu0 %v142
    %254 = vmatprep.subr.mxu0 %v147
    %255 = vmatpush1.msra.mxu0 %v146
    %256 = vmatprep.subr.mxu0 %v151
    %257 = vmatpush1.msra.mxu0 %v150
    %258 = vmatprep.subr.mxu0 %v155
    %259 = vmatpush1.msra.mxu0 %v154
    %260 = vmatprep.subr.mxu0 %v159
    %261 = vmatpush1.msra.mxu0 %v158
    %262 = vmatprep.subr.mxu0 %v163
    %263 = vmatpush1.msra.mxu0 %v162
    %264 = vmatprep.subr.mxu0 %v167
    %265 = vmatpush1.msra.mxu0 %v166
    %266 = vmatprep.subr.mxu0 %v171
    %267 = vmatpush1.msra.mxu0 %v170
    %268 = vmatprep.subr.mxu0 %v175
    %269 = vmatpush1.msra.mxu0 %v174
    %270 = vmatprep.subr.mxu0 %v179
    %271 = vmatpush1.msra.mxu0 %v178
    %272 = vmatprep.subr.mxu0 %v183
    %273 = vmatpush1.msra.mxu0 %v182
    %274 = vmatprep.subr.mxu0 %v187
    %275 = vmatpush1.msra.mxu0 %v186
    %276 = vmatprep.mubr.f32.mxu0 %v61
    %277 = vmatmul.mubr.f32.gmra.mrb[0].mxu0 %v60
    %v278 = vpop.f32.mrb[0].mxu0
    %v279 = vadd.f32 %v195, %v278
    %v280 = vpop.f32.mrb[0].mxu0
    %v281 = vadd.f32 %v199, %v280
    %282 = vdwg.mxu0
    %283 = vmatprep.subr.mxu0 %v65
    %284 = vmatpush1.msra.mxu0 %v64
    %285 = vmatprep.subr.mxu0 %v69
    %286 = vmatpush1.msra.mxu0 %v68
    %287 = vmatprep.subr.mxu0 %v73
    %288 = vmatpush1.msra.mxu0 %v72
    %289 = vmatprep.subr.mxu0 %v77
    %290 = vmatpush1.msra.mxu0 %v76
    %291 = vmatprep.subr.mxu0 %v81
    %292 = vmatpush1.msra.mxu0 %v80
    %293 = vmatprep.subr.mxu0 %v85
    %294 = vmatpush1.msra.mxu0 %v84
    %295 = vmatprep.subr.mxu0 %v89
    %296 = vmatpush1.msra.mxu0 %v88
    %297 = vmatprep.subr.mxu0 %v93
    %298 = vmatpush1.msra.mxu0 %v92
    %299 = vmatprep.subr.mxu0 %v97
    %300 = vmatpush1.msra.mxu0 %v96
    %301 = vmatprep.subr.mxu0 %v101
    %302 = vmatpush1.msra.mxu0 %v100
    %303 = vmatprep.subr.mxu0 %v105
    %304 = vmatpush1.msra.mxu0 %v104
    %305 = vmatprep.subr.mxu0 %v109
    %306 = vmatpush1.msra.mxu0 %v108
    %307 = vmatprep.subr.mxu0 %v113
    %308 = vmatpush1.msra.mxu0 %v112
    %309 = vmatprep.subr.mxu0 %v117
    %310 = vmatpush1.msra.mxu0 %v116
    %311 = vmatprep.subr.mxu0 %v121
    %312 = vmatpush1.msra.mxu0 %v120
    %313 = vmatprep.subr.mxu0 %v125
    %314 = vmatpush1.msra.mxu0 %v124
    %315 = vmatprep.subr.mxu0 %v129
    %316 = vmatpush1.msra.mxu0 %v128
    %317 = vmatprep.subr.mxu0 %v133
    %318 = vmatpush1.msra.mxu0 %v132
    %319 = vmatprep.subr.mxu0 %v137
    %320 = vmatpush1.msra.mxu0 %v136
    %321 = vmatprep.subr.mxu0 %v141
    %322 = vmatpush1.msra.mxu0 %v140
    %323 = vmatprep.subr.mxu0 %v145
    %324 = vmatpush1.msra.mxu0 %v144
    %325 = vmatprep.subr.mxu0 %v149
    %326 = vmatpush1.msra.mxu0 %v148
    %327 = vmatprep.subr.mxu0 %v153
    %328 = vmatpush1.msra.mxu0 %v152
    %329 = vmatprep.subr.mxu0 %v157
    %330 = vmatpush1.msra.mxu0 %v156
    %331 = vmatprep.subr.mxu0 %v161
    %332 = vmatpush1.msra.mxu0 %v160
    %333 = vmatprep.subr.mxu0 %v165
    %334 = vmatpush1.msra.mxu0 %v164
    %335 = vmatprep.subr.mxu0 %v169
    %336 = vmatpush1.msra.mxu0 %v168
    %337 = vmatprep.subr.mxu0 %v173
    %338 = vmatpush1.msra.mxu0 %v172
    %339 = vmatprep.subr.mxu0 %v177
    %340 = vmatpush1.msra.mxu0 %v176
    %341 = vmatprep.subr.mxu0 %v181
    %342 = vmatpush1.msra.mxu0 %v180
    %343 = vmatprep.subr.mxu0 %v185
    %344 = vmatpush1.msra.mxu0 %v184
    %345 = vmatprep.subr.mxu0 %v189
    %346 = vmatpush1.msra.mxu0 %v188
    %347 = vmatprep.mubr.f32.mxu0 %v61
    %348 = vmatmul.mubr.f32.gmra.mrb[0].mxu0 %v60
    %v349 = vpop.f32.mrb[0].mxu0
    %v350 = vadd.f32 %v203, %v349
    %v351 = vpop.f32.mrb[0].mxu0
    %v352 = vadd.f32 %v207, %v351
    %353 = vdwg.mxu0
    %v354 = vmax.f32 %v279, 0.0
    %v355 = vmax.f32 %v281, 0.0
    %v356 = vmax.f32 %v350, 0.0
    %v357 = vmax.f32 %v352, 0.0
    %v358 = vld [vmem:[#allocation7] sm:$0xff]
    %v359 = vld [vmem:[#allocation7 + $0x8] sm:$0xff]
    %v360 = vld [vmem:[#allocation7 + $0x10] sm:$0xff]
    %v361 = vld [vmem:[#allocation7 + $0x18] sm:$0xff]
    %v362 = vld [vmem:[#allocation7 + $0x20] sm:$0xff]
    %v363 = vld [vmem:[#allocation7 + $0x28] sm:$0xff]
    %v364 = vld [vmem:[#allocation7 + $0x30] sm:$0xff]
    %v365 = vld [vmem:[#allocation7 + $0x38] sm:$0xff]
    %v366 = vld [vmem:[#allocation7 + $0x40] sm:$0xff]
    %v367 = vld [vmem:[#allocation7 + $0x48] sm:$0xff]
    %v368 = vld [vmem:[#allocation7 + $0x50] sm:$0xff]
    %v369 = vld [vmem:[#allocation7 + $0x58] sm:$0xff]
    %v370 = vld [vmem:[#allocation7 + $0x60] sm:$0xff]
    %v371 = vld [vmem:[#allocation7 + $0x68] sm:$0xff]
    %v372 = vld [vmem:[#allocation7 + $0x70] sm:$0xff]
    %v373 = vld [vmem:[#allocation7 + $0x78] sm:$0xff]
    %v374 = vld [vmem:[#allocation7 + $0x80] sm:$0xff]
    %v375 = vld [vmem:[#allocation7 + $0x88] sm:$0xff]
    %v376 = vld [vmem:[#allocation7 + $0x90] sm:$0xff]
    %v377 = vld [vmem:[#allocation7 + $0x98] sm:$0xff]
    %v378 = vld [vmem:[#allocation7 + $0xa0] sm:$0xff]
    %v379 = vld [vmem:[#allocation7 + $0xa8] sm:$0xff]
    %v380 = vld [vmem:[#allocation7 + $0xb0] sm:$0xff]
    %v381 = vld [vmem:[#allocation7 + $0xb8] sm:$0xff]
    %v382 = vld [vmem:[#allocation7 + $0xc0] sm:$0xff]
    %v383 = vld [vmem:[#allocation7 + $0xc8] sm:$0xff]
    %v384 = vld [vmem:[#allocation7 + $0xd0] sm:$0xff]
    %v385 = vld [vmem:[#allocation7 + $0xd8] sm:$0xff]
    %v386 = vld [vmem:[#allocation7 + $0xe0] sm:$0xff]
    %v387 = vld [vmem:[#allocation7 + $0xe8] sm:$0xff]
    %v388 = vld [vmem:[#allocation7 + $0xf0] sm:$0xff]
    %v389 = vld [vmem:[#allocation7 + $0xf8] sm:$0xff]
    %v390 = vld [vmem:[#allocation7 + $0x100] sm:$0xff]
    %v391 = vld [vmem:[#allocation7 + $0x108] sm:$0xff]
    %v392 = vld [vmem:[#allocation7 + $0x110] sm:$0xff]
    %v393 = vld [vmem:[#allocation7 + $0x118] sm:$0xff]
    %v394 = vld [vmem:[#allocation7 + $0x120] sm:$0xff]
    %v395 = vld [vmem:[#allocation7 + $0x128] sm:$0xff]
    %v396 = vld [vmem:[#allocation7 + $0x130] sm:$0xff]
    %v397 = vld [vmem:[#allocation7 + $0x138] sm:$0xff]
    %v398 = vld [vmem:[#allocation7 + $0x140] sm:$0xff]
    %v399 = vld [vmem:[#allocation7 + $0x148] sm:$0xff]
    %v400 = vld [vmem:[#allocation7 + $0x150] sm:$0xff]
    %v401 = vld [vmem:[#allocation7 + $0x158] sm:$0xff]
    %v402 = vld [vmem:[#allocation7 + $0x160] sm:$0xff]
    %v403 = vld [vmem:[#allocation7 + $0x168] sm:$0xff]
    %v404 = vld [vmem:[#allocation7 + $0x170] sm:$0xff]
    %v405 = vld [vmem:[#allocation7 + $0x178] sm:$0xff]
    %v406 = vld [vmem:[#allocation7 + $0x180] sm:$0xff]
    %v407 = vld [vmem:[#allocation7 + $0x188] sm:$0xff]
    %v408 = vld [vmem:[#allocation7 + $0x190] sm:$0xff]
    %v409 = vld [vmem:[#allocation7 + $0x198] sm:$0xff]
    %v410 = vld [vmem:[#allocation7 + $0x1a0] sm:$0xff]
    %v411 = vld [vmem:[#allocation7 + $0x1a8] sm:$0xff]
    %v412 = vld [vmem:[#allocation7 + $0x1b0] sm:$0xff]
    %v413 = vld [vmem:[#allocation7 + $0x1b8] sm:$0xff]
    %v414 = vld [vmem:[#allocation7 + $0x1c0] sm:$0xff]
    %v415 = vld [vmem:[#allocation7 + $0x1c8] sm:$0xff]
    %v416 = vld [vmem:[#allocation7 + $0x1d0] sm:$0xff]
    %v417 = vld [vmem:[#allocation7 + $0x1d8] sm:$0xff]
    %v418 = vld [vmem:[#allocation7 + $0x1e0] sm:$0xff]
    %v419 = vld [vmem:[#allocation7 + $0x1e8] sm:$0xff]
    %v420 = vld [vmem:[#allocation7 + $0x1f0] sm:$0xff]
    %v421 = vld [vmem:[#allocation7 + $0x1f8] sm:$0xff]
    %v422 = vld [vmem:[%s4] sm:$0x1]
    %v424 = vlaneseq
    %v425 = vshrl.u32 %v424, 7
    %v426 = vsub.s32 0, %v425
    %v427 = vrot.slane %v422, %v426
    %429 = vmatprep.subr.mxu0 0.0
    %430 = vmatpush1.msra.mxu0 %v358
    %431 = vmatprep.subr.mxu0 0.0
    %432 = vmatpush1.msra.mxu0 %v359
    %433 = vmatprep.subr.mxu0 0.0
    %434 = vmatpush1.msra.mxu0 %v360
    %435 = vmatprep.subr.mxu0 0.0
    %436 = vmatpush1.msra.mxu0 %v361
    %437 = vmatprep.subr.mxu0 0.0
    %438 = vmatpush1.msra.mxu0 %v362
    %439 = vmatprep.subr.mxu0 0.0
    %440 = vmatpush1.msra.mxu0 %v363
    %441 = vmatprep.subr.mxu0 0.0
    %442 = vmatpush1.msra.mxu0 %v364
    %443 = vmatprep.subr.mxu0 0.0
    %444 = vmatpush1.msra.mxu0 %v365
    %445 = vmatprep.subr.mxu0 0.0
    %446 = vmatpush1.msra.mxu0 %v366
    %447 = vmatprep.subr.mxu0 0.0
    %448 = vmatpush1.msra.mxu0 %v367
    %449 = vmatprep.subr.mxu0 0.0
    %450 = vmatpush1.msra.mxu0 %v368
    %451 = vmatprep.subr.mxu0 0.0
    %452 = vmatpush1.msra.mxu0 %v369
    %453 = vmatprep.subr.mxu0 0.0
    %454 = vmatpush1.msra.mxu0 %v370
    %455 = vmatprep.subr.mxu0 0.0
    %456 = vmatpush1.msra.mxu0 %v371
    %457 = vmatprep.subr.mxu0 0.0
    %458 = vmatpush1.msra.mxu0 %v372
    %459 = vmatprep.subr.mxu0 0.0
    %460 = vmatpush1.msra.mxu0 %v373
    %461 = vmatprep.subr.mxu0 0.0
    %462 = vmatpush1.msra.mxu0 %v374
    %463 = vmatprep.subr.mxu0 0.0
    %464 = vmatpush1.msra.mxu0 %v375
    %465 = vmatprep.subr.mxu0 0.0
    %466 = vmatpush1.msra.mxu0 %v376
    %467 = vmatprep.subr.mxu0 0.0
    %468 = vmatpush1.msra.mxu0 %v377
    %469 = vmatprep.subr.mxu0 0.0
    %470 = vmatpush1.msra.mxu0 %v378
    %471 = vmatprep.subr.mxu0 0.0
    %472 = vmatpush1.msra.mxu0 %v379
    %473 = vmatprep.subr.mxu0 0.0
    %474 = vmatpush1.msra.mxu0 %v380
    %475 = vmatprep.subr.mxu0 0.0
    %476 = vmatpush1.msra.mxu0 %v381
    %477 = vmatprep.subr.mxu0 0.0
    %478 = vmatpush1.msra.mxu0 %v382
    %479 = vmatprep.subr.mxu0 0.0
    %480 = vmatpush1.msra.mxu0 %v383
    %481 = vmatprep.subr.mxu0 0.0
    %482 = vmatpush1.msra.mxu0 %v384
    %483 = vmatprep.subr.mxu0 0.0
    %484 = vmatpush1.msra.mxu0 %v385
    %485 = vmatprep.subr.mxu0 0.0
    %486 = vmatpush1.msra.mxu0 %v386
    %487 = vmatprep.subr.mxu0 0.0
    %488 = vmatpush1.msra.mxu0 %v387
    %489 = vmatprep.subr.mxu0 0.0
    %490 = vmatpush1.msra.mxu0 %v388
    %491 = vmatprep.subr.mxu0 0.0
    %492 = vmatpush1.msra.mxu0 %v389
    %493 = vmatprep.mubr.f32.mxu0 %v355
    %494 = vmatmul.mubr.f32.gmra.mrb[0].mxu0 %v354
    %v495 = vpop.f32.mrb[0].mxu0
    %v496 = vadd.f32 %v427, %v495
    %v497 = vpop.f32.mrb[0].mxu0
    %498 = vdwg.mxu0
    %499 = vmatprep.subr.mxu0 0.0
    %500 = vmatpush1.msra.mxu0 %v390
    %501 = vmatprep.subr.mxu0 0.0
    %502 = vmatpush1.msra.mxu0 %v391
    %503 = vmatprep.subr.mxu0 0.0
    %504 = vmatpush1.msra.mxu0 %v392
    %505 = vmatprep.subr.mxu0 0.0
    %506 = vmatpush1.msra.mxu0 %v393
    %507 = vmatprep.subr.mxu0 0.0
    %508 = vmatpush1.msra.mxu0 %v394
    %509 = vmatprep.subr.mxu0 0.0
    %510 = vmatpush1.msra.mxu0 %v395
    %511 = vmatprep.subr.mxu0 0.0
    %512 = vmatpush1.msra.mxu0 %v396
    %513 = vmatprep.subr.mxu0 0.0
    %514 = vmatpush1.msra.mxu0 %v397
    %515 = vmatprep.subr.mxu0 0.0
    %516 = vmatpush1.msra.mxu0 %v398
    %517 = vmatprep.subr.mxu0 0.0
    %518 = vmatpush1.msra.mxu0 %v399
    %519 = vmatprep.subr.mxu0 0.0
    %520 = vmatpush1.msra.mxu0 %v400
    %521 = vmatprep.subr.mxu0 0.0
    %522 = vmatpush1.msra.mxu0 %v401
    %523 = vmatprep.subr.mxu0 0.0
    %524 = vmatpush1.msra.mxu0 %v402
    %525 = vmatprep.subr.mxu0 0.0
    %526 = vmatpush1.msra.mxu0 %v403
    %527 = vmatprep.subr.mxu0 0.0
    %528 = vmatpush1.msra.mxu0 %v404
    %529 = vmatprep.subr.mxu0 0.0
    %530 = vmatpush1.msra.mxu0 %v405
    %531 = vmatprep.subr.mxu0 0.0
    %532 = vmatpush1.msra.mxu0 %v406
    %533 = vmatprep.subr.mxu0 0.0
    %534 = vmatpush1.msra.mxu0 %v407
    %535 = vmatprep.subr.mxu0 0.0
    %536 = vmatpush1.msra.mxu0 %v408
    %537 = vmatprep.subr.mxu0 0.0
    %538 = vmatpush1.msra.mxu0 %v409
    %539 = vmatprep.subr.mxu0 0.0
    %540 = vmatpush1.msra.mxu0 %v410
    %541 = vmatprep.subr.mxu0 0.0
    %542 = vmatpush1.msra.mxu0 %v411
    %543 = vmatprep.subr.mxu0 0.0
    %544 = vmatpush1.msra.mxu0 %v412
    %545 = vmatprep.subr.mxu0 0.0
    %546 = vmatpush1.msra.mxu0 %v413
    %547 = vmatprep.subr.mxu0 0.0
    %548 = vmatpush1.msra.mxu0 %v414
    %549 = vmatprep.subr.mxu0 0.0
    %550 = vmatpush1.msra.mxu0 %v415
    %551 = vmatprep.subr.mxu0 0.0
    %552 = vmatpush1.msra.mxu0 %v416
    %553 = vmatprep.subr.mxu0 0.0
    %554 = vmatpush1.msra.mxu0 %v417
    %555 = vmatprep.subr.mxu0 0.0
    %556 = vmatpush1.msra.mxu0 %v418
    %557 = vmatprep.subr.mxu0 0.0
    %558 = vmatpush1.msra.mxu0 %v419
    %559 = vmatprep.subr.mxu0 0.0
    %560 = vmatpush1.msra.mxu0 %v420
    %561 = vmatprep.subr.mxu0 0.0
    %562 = vmatpush1.msra.mxu0 %v421
    %563 = vmatprep.mubr.f32.mxu0 %v357
    %564 = vmatmul.mubr.f32.gmra.mrb[0].mxu0 %v356
    %v565 = vpop.f32.mrb[0].mxu0
    %v566 = vadd.f32 %v496, %v565
    %v567 = vpop.f32.mrb[0].mxu0
    %568 = vdwg.mxu0
    %v569 = vmul.f32 %v566, %v566
    %570 = vadd.xlane.f32.xlu0 %v569
    %v571 = vpop.xlane.xlu0 %570
    %v572 = vmax.f32 %v571, 1e-24
    %v573 = vrsqrt.pop %v572
    %v574 = vmul.f32 %v566, %v573
    %575 = vst [vmem:[#allocation8] sm:$0xff] %v574
    // Predicated region
    $region34: #{biovil_embed_head.1} parent=1 // pred_check
      _
    $region35: #{biovil_embed_head.1} parent=1 // pred_check_branch
      %577 = sbr.rel (0) target = $region37
    $region36: #{biovil_embed_head.1} parent=1 // pred_region
      %s579 = ssub.s32 128, 128
      %580 = vsyncadd [#allocation4], %s579
      %s582 = sshll.u32 [#allocation8], 4
      %s583 = int_to_ptr.vmem [resolvable:$true] %s582
      %585 = dma.vmem_to_hbm [thread:$0]  %s583, 128, %s5, [#allocation4]
    $region37: #{biovil_embed_head.1} parent=1 // pred_fallthru
      _
    // Predicated region
    $region38: #{biovil_embed_head.1} parent=1 // pred_check
      _
    $region39: #{biovil_embed_head.1} parent=1 // pred_check_branch
      %587 = sbr.rel (0) target = $region41
    $region40: #{biovil_embed_head.1} parent=1 // pred_region
      %588 = dma.done [#allocation4], 128
    $region41: #{biovil_embed_head.1} parent=1 // pred_fallthru
      _
    %589 = vsyncpa [#allocation3], 1
    %590 = vsyncpa [#allocation6], 1
    %591 = vsyncpa [#allocation4], 1

</llo_original>
